<compile_context>
chip_gen: v7x
topology: tpu7x:2x2x1
jax: 0.10.0
libtpu: 0.0.40
codegen_flags: <defaults>
</compile_context>

<pallas_src>
import functools

import jax
import jax.numpy as jnp
from jax.experimental import pallas as pl
from jax.experimental.pallas import tpu as pltpu

NEG_BIG = -1e30          # plain Python float -> literal (NOT a captured jnp const)
LEAKY_SLOPE = 0.2        # PyG GATConv default negative_slope


def _round_up(x, m):
    return ((x + m - 1) // m) * m


# --- capability probes -------------------------------------------------------
try:   # single-buffering of grid-invariant operands (pipeline_mode API)
    pl.BlockSpec((8, 128), lambda i: (0, 0), pipeline_mode=pl.Buffered(1))
    _HAS_BUFFERED = True
except Exception:          # older Pallas: fall back to default double buffering
    _HAS_BUFFERED = False


def _vmem_budget_bytes():
    """Per-generation VMEM budget with headroom (v7x 64MiB->48, v5e/v6e 128->96)."""
    cap = 64 * 1024 * 1024                     # conservative default (v7x per-TC)
    try:
        cap = int(getattr(pltpu.get_tpu_info(), "vmem_capacity_bytes", cap))
    except Exception:
        pass
    return (cap * 3) // 4                      # leave room for compiler scratch


def _choose_tile(n, wpad, budget):
    """Largest dst-row tile whose attention-kernel VMEM estimate fits `budget`."""
    n8 = _round_up(max(n, 1), 8)
    for tile in (512, 256, 128, 64, 32, 16, 8):
        if tile > n8:
            continue
        n_pad = _round_up(n, tile)
        resident = 2 * n_pad * wpad * 2 + 8 * n_pad * 2   # bf16 slab + alpha_src^T
        stream = 2 * tile * n_pad                         # int8 adj, double-buffered
        temps = 4 * tile * n_pad * 4                      # e/p softmax f32 temporaries
        outbuf = 2 * tile * wpad * 4
        if resident + stream + temps + outbuf <= budget:
            return tile
    # TODO(synk): for graphs whose [tile, N] softmax temporaries / resident slab
    # do not fit VMEM even at tile=8, tile the src axis too (flash-style online
    # softmax) and skip empty adjacency tiles via scalar-prefetched nnz counts.
    return 8


def _resident_spec(shape, buffered):
    """BlockSpec for a grid-invariant (VMEM-resident) operand."""
    index_map = lambda i: (0,) * len(shape)
    if buffered and _HAS_BUFFERED:
        return pl.BlockSpec(shape, index_map, pipeline_mode=pl.Buffered(1))
    return pl.BlockSpec(shape, index_map)


# ----------------------------------------------------------------------------
# Kernel 1: per-node-row transform — one fused bf16 matmul producing the slab
#   slab columns: [ xw (hc) | alpha_src (H) | alpha_dst (H) | side (sdim) | 0 pad ]
# ----------------------------------------------------------------------------
def _transform_kernel(x_ref, w_ref, b_ref, slab_ref):
    acc = jnp.dot(x_ref[...], w_ref[...], preferred_element_type=jnp.float32)
    slab_ref[...] = (acc + b_ref[...]).astype(slab_ref.dtype)


def gat_transform(x, wcat, bcat, *, tile, buffered, vmem_limit):
    n_pad, f = x.shape
    wpad = wcat.shape[1]
    return pl.pallas_call(
        _transform_kernel,
        out_shape=jax.ShapeDtypeStruct((n_pad, wpad), jnp.bfloat16),
        grid=(n_pad // tile,),
        in_specs=[
            pl.BlockSpec((tile, f), lambda i: (i, 0)),       # x row tile (bf16)
            _resident_spec((f, wpad), buffered),             # fused weight (bf16)
            _resident_spec((1, wpad), buffered),             # fused bias (f32)
        ],
        out_specs=pl.BlockSpec((tile, wpad), lambda i: (i, 0)),
        compiler_params=pltpu.CompilerParams(
            dimension_semantics=("parallel",),
            vmem_limit_bytes=vmem_limit),
    )(x, wcat, bcat)


# ----------------------------------------------------------------------------
# Kernel 2: dst-row-tiled attention + aggregation + fused epilogue
#   mode == "concat_elu":       concat heads + bias, damping(-lbda*side), ELU
#   mode == "mean_logsoftmax":  mean heads + bias, damping(-lbda*side), log_softmax
# ----------------------------------------------------------------------------
def _gat_attn_kernel(adj_ref, slab_ref, asrc_t_ref, b_ref, out_ref, *,
                     heads, out_ch, hc, sdim, lbda, mode):
    t = out_ref.shape[0]
    row0 = pl.multiple_of(pl.program_id(0) * t, t)
    # dst-row view of the resident slab: alpha_dst / side cols (no per-step DMA)
    dst_rows = slab_ref[pl.ds(row0, t), :]                               # [T, Wpad]
    adst = dst_rows[:, hc + heads:hc + 2 * heads].astype(jnp.float32)    # [T, H]
    side = dst_rows[:, hc + 2 * heads:hc + 2 * heads + sdim].astype(jnp.float32)

    mask = adj_ref[...] > 0              # int8 -> bool directly, no f32 cast

    head_outs = []
    for h in range(heads):               # small static loop over heads
        asrc = asrc_t_ref[h:h + 1, :].astype(jnp.float32)                # [1, Ns]
        e = adst[:, h:h + 1] + asrc                                      # [T, Ns]
        e = jnp.maximum(e, LEAKY_SLOPE * e)                              # leaky relu
        e = jnp.where(mask, e, NEG_BIG)
        e = e - jnp.max(e, axis=1, keepdims=True)
        p = jnp.exp(e)                   # masked entries underflow to exactly 0
        denom = jnp.sum(p, axis=1, keepdims=True)                        # [T, 1]
        # bf16 MXU aggregation of the UNnormalized weights; normalize the small
        # [T, C] result afterwards (saves a [T, Ns] VPU multiply per head).
        ho = jnp.dot(p.astype(jnp.bfloat16),
                     slab_ref[:, h * out_ch:(h + 1) * out_ch],
                     preferred_element_type=jnp.float32)                 # [T, C]
        head_outs.append(ho * pl.reciprocal(denom, approx=True))

    bias = b_ref[...]                                                    # [1, out]
    if mode == "concat_elu":
        out = head_outs[0] if heads == 1 else jnp.concatenate(head_outs, axis=1)
        side_rep = side if heads == 1 else jnp.concatenate([side] * heads, axis=1)
        v = out + bias - lbda * side_rep            # epilogue once, lane-denser
        out_ref[...] = jnp.where(v > 0.0, v,
                                 jnp.exp(jnp.minimum(v, 0.0)) - 1.0
                                 ).astype(out_ref.dtype)
    else:  # "mean_logsoftmax"
        acc = head_outs[0]
        for ho in head_outs[1:]:
            acc = acc + ho
        v = acc * (1.0 / heads) + bias - lbda * side
        s = v - jnp.max(v, axis=1, keepdims=True)
        out_ref[...] = (s - jnp.log(jnp.sum(jnp.exp(s), axis=1, keepdims=True))
                        ).astype(out_ref.dtype)


def gat_attention(adj_i8, slab, asrc_t, bias, *, heads, out_ch, hc, sdim,
                  mode, lbda, tile, out_dtype, buffered, vmem_limit):
    n_pad = adj_i8.shape[0]
    wpad = slab.shape[1]
    out_dim = heads * out_ch if mode == "concat_elu" else out_ch
    kern = functools.partial(_gat_attn_kernel, heads=heads, out_ch=out_ch,
                             hc=hc, sdim=sdim, lbda=float(lbda), mode=mode)
    return pl.pallas_call(
        kern,
        out_shape=jax.ShapeDtypeStruct((n_pad, out_dim), out_dtype),
        grid=(n_pad // tile,),
        in_specs=[
            pl.BlockSpec((tile, n_pad), lambda i: (i, 0)),   # adj dst tile (int8)
            _resident_spec((n_pad, wpad), buffered),         # slab: xw|alpha|side
            _resident_spec((heads, n_pad), buffered),        # alpha_src^T
            _resident_spec((1, out_dim), buffered),          # conv bias (f32)
        ],
        out_specs=pl.BlockSpec((tile, out_dim), lambda i: (i, 0)),
        compiler_params=pltpu.CompilerParams(
            dimension_semantics=("parallel",),   # dst tiles independent (2 TCs v7x)
            vmem_limit_bytes=vmem_limit),
    )(adj_i8, slab, asrc_t, bias)


# ----------------------------------------------------------------------------
# Host-side glue
# ----------------------------------------------------------------------------
def _alpha_weight(att_src, att_dst):
    """Block-diagonal [H*C, 2H] matrix so xw @ A yields all per-head alphas."""
    h, c = att_src.shape
    a = jnp.zeros((h * c, 2 * h), jnp.float32)
    for i in range(h):
        a = a.at[i * c:(i + 1) * c, i].set(att_src[i])
        a = a.at[i * c:(i + 1) * c, h + i].set(att_dst[i])
    return a


def _fused_weight(w, att_src, att_dst, fc_w, fc_b):
    """[W | W@A | fc_w] zero-padded to a lane-dense (multiple-of-128) width."""
    f, hc = w.shape
    h = att_src.shape[0]
    sdim = fc_w.shape[1]
    wa = w @ _alpha_weight(att_src, att_dst)                   # [F, 2H]
    wcat = jnp.concatenate([w, wa, fc_w], axis=1)
    width = hc + 2 * h + sdim
    wpad = _round_up(width, 128)
    wcat = jnp.pad(wcat, ((0, 0), (0, wpad - width)))
    bcat = jnp.concatenate(
        [jnp.zeros((hc + 2 * h,), jnp.float32), fc_b,
         jnp.zeros((wpad - width,), jnp.float32)]).reshape(1, -1)
    return wcat.astype(jnp.bfloat16), bcat


def gat_forward(x, adj, params, *, heads, nhid, nclass, lbdas, buffered=True):
    n = x.shape[0]
    hc1, hc2 = heads * nhid, nclass

    w1cat, b1cat = _fused_weight(params["w1"], params["att_src1"],
                                 params["att_dst1"], params["fc1_w"],
                                 params["fc1_b"])
    w2cat, b2cat = _fused_weight(params["w2"], params["att_src2"],
                                 params["att_dst2"], params["fc2_w"],
                                 params["fc2_b"])

    vmem_limit = _vmem_budget_bytes()
    tile = _choose_tile(n, max(w1cat.shape[1], w2cat.shape[1]), vmem_limit)
    n_pad = _round_up(n, tile)

    x_p = x if n_pad == n else jnp.pad(x, ((0, n_pad - n), (0, 0)))
    adj_p = adj if n_pad == n else jnp.pad(adj, ((0, n_pad - n), (0, n_pad - n)))
    adj_i8 = (adj_p > 0).astype(jnp.int8)   # adj[dst, src], self-loops expected

    # ---- layer 1: fused transform + attention + fc1 damping + ELU ----
    slab1 = gat_transform(x_p.astype(jnp.bfloat16), w1cat, b1cat,
                          tile=tile, buffered=buffered, vmem_limit=vmem_limit)
    asrc1_t = jnp.transpose(slab1[:, hc1:hc1 + heads])     # one tiny XLA transpose
    h1 = gat_attention(adj_i8, slab1, asrc1_t, params["b1"].reshape(1, -1),
                       heads=heads, out_ch=nhid, hc=hc1, sdim=nhid,
                       mode="concat_elu", lbda=lbdas[0], tile=tile,
                       out_dtype=jnp.bfloat16, buffered=buffered,
                       vmem_limit=vmem_limit)

    # ---- layer 2: fused transform + attention + fc2 damping + log_softmax ----
    slab2 = gat_transform(h1, w2cat, b2cat, tile=tile, buffered=buffered,
                          vmem_limit=vmem_limit)
    asrc2_t = jnp.transpose(slab2[:, hc2:hc2 + 1])
    out = gat_attention(adj_i8, slab2, asrc2_t, params["b2"].reshape(1, -1),
                        heads=1, out_ch=nclass, hc=hc2, sdim=nclass,
                        mode="mean_logsoftmax", lbda=lbdas[1], tile=tile,
                        out_dtype=jnp.float32, buffered=buffered,
                        vmem_limit=vmem_limit)
    return out[:n]


# TODO(synk): training loop (fit / early stopping), attention dropout
# (training-mode only) and the train_lbda==1 trainable-diagonal-lambda path are
# not part of the eval forward and are omitted.


# ----------------------------------------------------------------------------
# Pure-JAX reference (f32) for validation
# ----------------------------------------------------------------------------
def _reference_forward(x, adj, params, *, heads, nhid, nclass, lbdas):
    def conv(h, w, a_src, a_dst, b, out_ch, n_heads, concat):
        xw = h @ w
        xw_h = xw.reshape(-1, n_heads, out_ch)                    # [N, H, C]
        asrc = jnp.einsum("nhc,hc->nh", xw_h, a_src)
        adst = jnp.einsum("nhc,hc->nh", xw_h, a_dst)
        e = adst[:, None, :] + asrc[None, :, :]                   # [dst, src, H]
        e = jnp.where(e > 0, e, LEAKY_SLOPE * e)
        e = jnp.where((adj > 0)[:, :, None], e, NEG_BIG)
        attn = jax.nn.softmax(e, axis=1)
        out = jnp.einsum("dsh,shc->dhc", attn, xw_h)
        if concat:
            return out.reshape(-1, n_heads * out_ch) + b
        return out.mean(axis=1) + b

    out1 = conv(x, params["w1"], params["att_src1"], params["att_dst1"],
                params["b1"], nhid, heads, True)
    side1 = jnp.concatenate([x @ params["fc1_w"] + params["fc1_b"]] * heads, axis=1)
    h1 = jax.nn.elu(out1 - lbdas[0] * side1)
    out2 = conv(h1, params["w2"], params["att_src2"], params["att_dst2"],
                params["b2"], nclass, 1, False)
    side2 = h1 @ params["fc2_w"] + params["fc2_b"]
    return jax.nn.log_softmax(out2 - lbdas[1] * side2, axis=1)


if __name__ == "__main__":
    key = jax.random.PRNGKey(0)
    N, nfeat, nhid, heads, nclass = 16, 8, 8, 4, 4
    lbdas = (0.1, 0.2)          # damping == 1, train_lbda == 0 (constant lambdas)

    ks = jax.random.split(key, 12)
    x = jax.random.normal(ks[0], (N, nfeat), jnp.float32)

    # deterministic symmetric adjacency with self loops, adj[dst, src]
    r = jax.random.bernoulli(ks[1], 0.3, (N, N)).astype(jnp.float32)
    adj = jnp.maximum(r, r.T)
    adj = jnp.maximum(adj, jnp.eye(N, dtype=jnp.float32))

    def init(k, shape, scale=0.2):
        return scale * jax.random.normal(k, shape, jnp.float32)

    params = dict(
        # GATConv1: nfeat -> nhid, `heads` attention heads, concat
        w1=init(ks[2], (nfeat, heads * nhid)),
        att_src1=init(ks[3], (heads, nhid)),
        att_dst1=init(ks[4], (heads, nhid)),
        b1=init(ks[5], (heads * nhid,)),
        # GATConv2: heads*nhid -> nclass, 1 output head, concat=False
        w2=init(ks[6], (heads * nhid, nclass)),
        att_src2=init(ks[7], (1, nclass)),
        att_dst2=init(ks[8], (1, nclass)),
        b2=init(ks[9], (nclass,)),
        # side-branch linears
        fc1_w=init(ks[10], (nfeat, nhid)),
        fc1_b=jnp.zeros((nhid,), jnp.float32),
        fc2_w=init(ks[11], (heads * nhid, nclass)),
        fc2_b=jnp.zeros((nclass,), jnp.float32),
    )

    def run(buffered):
        o = gat_forward(x, adj, params, heads=heads, nhid=nhid,
                        nclass=nclass, lbdas=lbdas, buffered=buffered)
        return jax.block_until_ready(o)

    try:
        out = run(True)
    except Exception:
        # fall back to default double-buffered residents if Buffered(1) residents
        # are rejected by this Pallas/Mosaic version.
        out = run(False)

    assert out.shape == (N, nclass)
    assert bool(jnp.all(jnp.isfinite(out)))
    # log_softmax rows must sum to ~1 in prob space (exact property of epilogue)
    assert bool(jnp.all(jnp.abs(jnp.sum(jnp.exp(out), axis=1) - 1.0) < 1e-4))
    # loose tolerance: bf16 feature/alpha/side storage, bf16 MXU aggregation and
    # approx-reciprocal softmax denominator vs the pure-f32 reference.
    ref = _reference_forward(x, adj, params, heads=heads, nhid=nhid,
                             nclass=nclass, lbdas=lbdas)
    assert float(jnp.max(jnp.abs(out - ref))) < 1.5e-1
    print("KERNEL_OK")
</pallas_src>

<mosaic_0001>
module attributes {stable_mosaic.version = 11 : i64} {
  func.func @_transform_kernel(%arg0: i32, %arg1: memref<16x8xbf16, #tpu.memory_space<vmem>>, %arg2: memref<8x128xbf16, #tpu.memory_space<vmem>>, %arg3: memref<1x128xf32, #tpu.memory_space<vmem>>, %arg4: memref<16x128xbf16, #tpu.memory_space<vmem>>) attributes {dimension_semantics = [#tpu.dimension_semantics<parallel>], iteration_bounds = array<i64: 1>, scalar_prefetch = 0 : i64, scratch_operands = 0 : i64, tpu.core_type = #tpu.core_type<tc>, window_params = [{transform_indices = @transform_0, window_bounds = array<i64: 16, 8>}, {pipeline_mode = #tpu.pipeline_mode<synchronous>, transform_indices = @transform_1, window_bounds = array<i64: 8, 128>}, {pipeline_mode = #tpu.pipeline_mode<synchronous>, transform_indices = @transform_2, window_bounds = array<i64: 1, 128>}, {transform_indices = @transform_3, window_bounds = array<i64: 16, 128>}]} {
    %c0 = arith.constant 0 : index
    %c0_0 = arith.constant 0 : index
    %0 = vector.load %arg1[%c0, %c0_0] : memref<16x8xbf16, #tpu.memory_space<vmem>>, vector<16x8xbf16>
    %c0_1 = arith.constant 0 : index
    %c0_2 = arith.constant 0 : index
    %1 = vector.load %arg2[%c0_1, %c0_2] : memref<8x128xbf16, #tpu.memory_space<vmem>>, vector<8x128xbf16>
    %cst = arith.constant dense<0.000000e+00> : vector<16x128xf32>
    %2 = tpu.matmul %0, %1, %cst {dimension_numbers = #tpu.dot_dimension_numbers<[1], [0], [0], [1], [0, 0, 1, 1], [], []>} : vector<16x8xbf16>, vector<8x128xbf16>, vector<16x128xf32> -> vector<16x128xf32>
    %c0_3 = arith.constant 0 : index
    %c0_4 = arith.constant 0 : index
    %3 = vector.load %arg3[%c0_3, %c0_4] : memref<1x128xf32, #tpu.memory_space<vmem>>, vector<1x128xf32>
    %4 = vector.broadcast %3 : vector<1x128xf32> to vector<16x128xf32>
    %5 = arith.addf %2, %4 : vector<16x128xf32>
    %6 = arith.truncf %5 : vector<16x128xf32> to vector<16x128xbf16>
    %c0_5 = arith.constant 0 : index
    %c0_6 = arith.constant 0 : index
    %7 = vector.load %arg4[%c0_5, %c0_6] : memref<16x128xbf16, #tpu.memory_space<vmem>>, vector<16x128xbf16>
    tpu.vector_store %arg4[%c0_5, %c0_6], %6 {strides = array<i32>} : memref<16x128xbf16, #tpu.memory_space<vmem>>, vector<16x128xbf16>,
    return
  }
  func.func @transform_0(%arg0: i32) -> (i32, i32) {
    %c0_i32 = arith.constant 0 : i32
    %c0_i32_0 = arith.constant 0 : i32
    return %arg0, %c0_i32 : i32, i32
  }
  func.func @transform_1(%arg0: i32) -> (i32, i32) {
    %c0_i32 = arith.constant 0 : i32
    %c0_i32_0 = arith.constant 0 : i32
    %c0_i32_1 = arith.constant 0 : i32
    return %c0_i32, %c0_i32_0 : i32, i32
  }
  func.func @transform_2(%arg0: i32) -> (i32, i32) {
    %c0_i32 = arith.constant 0 : i32
    %c0_i32_0 = arith.constant 0 : i32
    %c0_i32_1 = arith.constant 0 : i32
    return %c0_i32, %c0_i32_0 : i32, i32
  }
  func.func @transform_3(%arg0: i32) -> (i32, i32) {
    %c0_i32 = arith.constant 0 : i32
    %c0_i32_0 = arith.constant 0 : i32
    return %arg0, %c0_i32 : i32, i32
  }
}

module attributes {stable_mosaic.version = 11 : i64} {
  func.func @_transform_kernel(%arg0: i32, %arg1: memref<16x8xbf16, #tpu.memory_space<vmem>>, %arg2: memref<8x128xbf16, #tpu.memory_space<vmem>>, %arg3: memref<1x128xf32, #tpu.memory_space<vmem>>, %arg4: memref<16x128xbf16, #tpu.memory_space<vmem>>) attributes {dimension_semantics = [#tpu.dimension_semantics<parallel>], iteration_bounds = array<i64: 1>, scalar_prefetch = 0 : i64, scratch_operands = 0 : i64, tpu.core_type = #tpu.core_type<tc>, window_params = [{transform_indices = @transform_0, window_bounds = array<i64: 16, 8>}, {pipeline_mode = #tpu.pipeline_mode<synchronous>, transform_indices = @transform_1, window_bounds = array<i64: 8, 128>}, {pipeline_mode = #tpu.pipeline_mode<synchronous>, transform_indices = @transform_2, window_bounds = array<i64: 1, 128>}, {transform_indices = @transform_3, window_bounds = array<i64: 16, 128>}]} {
    %c0 = arith.constant 0 : index
    %c0_0 = arith.constant 0 : index
    %0 = vector.load %arg1[%c0, %c0_0] : memref<16x8xbf16, #tpu.memory_space<vmem>>, vector<16x8xbf16>
    %c0_1 = arith.constant 0 : index
    %c0_2 = arith.constant 0 : index
    %1 = vector.load %arg2[%c0_1, %c0_2] : memref<8x128xbf16, #tpu.memory_space<vmem>>, vector<8x128xbf16>
    %cst = arith.constant dense<0.000000e+00> : vector<16x128xf32>
    %2 = tpu.matmul %0, %1, %cst {dimension_numbers = #tpu.dot_dimension_numbers<[1], [0], [0], [1], [0, 0, 1, 1], [], []>} : vector<16x8xbf16>, vector<8x128xbf16>, vector<16x128xf32> -> vector<16x128xf32>
    %c0_3 = arith.constant 0 : index
    %c0_4 = arith.constant 0 : index
    %3 = vector.load %arg3[%c0_3, %c0_4] : memref<1x128xf32, #tpu.memory_space<vmem>>, vector<1x128xf32>
    %4 = vector.broadcast %3 : vector<1x128xf32> to vector<16x128xf32>
    %5 = arith.addf %2, %4 : vector<16x128xf32>
    %6 = arith.truncf %5 : vector<16x128xf32> to vector<16x128xbf16>
    %c0_5 = arith.constant 0 : index
    %c0_6 = arith.constant 0 : index
    %7 = vector.load %arg4[%c0_5, %c0_6] : memref<16x128xbf16, #tpu.memory_space<vmem>>, vector<16x128xbf16>
    tpu.vector_store %arg4[%c0_5, %c0_6], %6 {strides = array<i32>} : memref<16x128xbf16, #tpu.memory_space<vmem>>, vector<16x128xbf16>,
    return
  }
  func.func @transform_0(%arg0: i32) -> (i32, i32) {
    %c0_i32 = arith.constant 0 : i32
    %c0_i32_0 = arith.constant 0 : i32
    return %arg0, %c0_i32 : i32, i32
  }
  func.func @transform_1(%arg0: i32) -> (i32, i32) {
    %c0_i32 = arith.constant 0 : i32
    %c0_i32_0 = arith.constant 0 : i32
    %c0_i32_1 = arith.constant 0 : i32
    return %c0_i32, %c0_i32_0 : i32, i32
  }
  func.func @transform_2(%arg0: i32) -> (i32, i32) {
    %c0_i32 = arith.constant 0 : i32
    %c0_i32_0 = arith.constant 0 : i32
    %c0_i32_1 = arith.constant 0 : i32
    return %c0_i32, %c0_i32_0 : i32, i32
  }
  func.func @transform_3(%arg0: i32) -> (i32, i32) {
    %c0_i32 = arith.constant 0 : i32
    %c0_i32_0 = arith.constant 0 : i32
    return %arg0, %c0_i32 : i32, i32
  }
}

</mosaic_0001>

<llo_original>
// kernel: tpu_custom_call.1
$region0: #{tpu_custom_call.1}
  #allocation0 [shape = 'u32[]', space=smem, size = 0x4, offset = 0x4, fixed_abs, tag = 'smem constant byte address 0x4 - core index']
  #allocation1 [shape = 'u32[144,128]{1,0:T(1,128)}', space=vmem, size = 0x12000, scoped, tag = 'internal scratch']
  %s0 = inlined_call_operand.vmem [shape: bf16[16,8], index: 0, kind: input, shape index: {}]
  %s1 = inlined_call_operand.vmem [shape: bf16[8,128], index: 1, kind: input, shape index: {}]
  %s2 = inlined_call_operand.vmem [shape: f32[1,128], index: 2, kind: input, shape index: {}]
  %s3 = inlined_call_operand.hbm [shape: bf16[16,128], index: 3, kind: output, shape index: {}]
  %s4 = sld [smem:[#allocation0]]
  $region22: #{tpu_custom_call.1} parent=0
    _
  %s6 = ssub.s32 1, %s4
  %s7 = scalar_select 0, %s6, %s4
  $region1: #{tpu_custom_call.1} parent=0
    #allocation2 [shape = 'u8[4096]{0}', space=vmem, size = 0x1000, scoped, tag = 'output window, operand 0, single buffered']
    #allocation3 [shape = 's32[1]{0}', space=sflag, size = 0x4, scoped, tag = 'scoped memory for tpu_custom_call.1']
    %8 = vsyncpa [#allocation3], 0
    // Predicated region
    $region2: #{tpu_custom_call.1} parent=1 // pred_check
      _
    $region3: #{tpu_custom_call.1} parent=1 // pred_check_branch
      %10 = sbr.rel (0) target = $region5
    $region4: #{tpu_custom_call.1} parent=1 // pred_region
      _
    $region5: #{tpu_custom_call.1} parent=1 // pred_fallthru
      _
    // Predicated region
    $region6: #{tpu_custom_call.1} parent=1 // pred_check
      _
    $region7: #{tpu_custom_call.1} parent=1 // pred_check_branch
      %12 = sbr.rel (0) target = $region9
    $region8: #{tpu_custom_call.1} parent=1 // pred_region
      _
    $region9: #{tpu_custom_call.1} parent=1 // pred_fallthru
      _
    // Predicated region
    $region10: #{tpu_custom_call.1} parent=1 // pred_check
      _
    $region11: #{tpu_custom_call.1} parent=1 // pred_check_branch
      %14 = sbr.rel (0) target = $region13
    $region12: #{tpu_custom_call.1} parent=1 // pred_region
      _
    $region13: #{tpu_custom_call.1} parent=1 // pred_fallthru
      _
    %v16 = vld [vmem:[%s0] sm:$0xf]
    %v17 = vld [vmem:[%s0 + $0x4] sm:$0xf]
    %v18 = vld [vmem:[%s1] sm:$0xf]
    %v19 = vld [vmem:[%s2] sm:$0x1]
    %v21 = vlaneseq
    %v22 = vshrl.u32 %v21, 7
    %v23 = vsub.s32 0, %v22
    %v24 = vrot.slane %v19, %v23
    %v28 = vunpack.c.l.b16 %v16
    %v29 = vunpack.c.l.b16 %v17
    %v30 = vpack.c.b16 %v29, %v28
    %vm31 = vcmask 64512
    %v33 = vsel %vm31, %v30, 0
    %vm35 = vcmask 1043456
    %v37 = vsel %vm35, %v18, 0
    %39 = vmatprep.subr.bf16.mxu0 0
    %40 = vmatpush1.bf16.msra.mxu0 %v37
    %41 = vmatprep.subr.bf16.mxu0 0
    %42 = vmatpush1.bf16.msra.mxu0 0
    %43 = vmatprep.subr.bf16.mxu0 0
    %44 = vmatpush1.bf16.msra.mxu0 0
    %45 = vmatprep.subr.bf16.mxu0 0
    %46 = vmatpush1.bf16.msra.mxu0 0
    %47 = vmatprep.subr.bf16.mxu0 0
    %48 = vmatpush1.bf16.msra.mxu0 0
    %49 = vmatprep.subr.bf16.mxu0 0
    %50 = vmatpush1.bf16.msra.mxu0 0
    %51 = vmatprep.subr.bf16.mxu0 0
    %52 = vmatpush1.bf16.msra.mxu0 0
    %53 = vmatprep.subr.bf16.mxu0 0
    %54 = vmatpush1.bf16.msra.mxu0 0
    %55 = vmatprep.subr.bf16.mxu0 0
    %56 = vmatpush1.bf16.msra.mxu0 0
    %57 = vmatprep.subr.bf16.mxu0 0
    %58 = vmatpush1.bf16.msra.mxu0 0
    %59 = vmatprep.subr.bf16.mxu0 0
    %60 = vmatpush1.bf16.msra.mxu0 0
    %61 = vmatprep.subr.bf16.mxu0 0
    %62 = vmatpush1.bf16.msra.mxu0 0
    %63 = vmatprep.subr.bf16.mxu0 0
    %64 = vmatpush1.bf16.msra.mxu0 0
    %65 = vmatprep.subr.bf16.mxu0 0
    %66 = vmatpush1.bf16.msra.mxu0 0
    %67 = vmatprep.subr.bf16.mxu0 0
    %68 = vmatpush1.bf16.msra.mxu0 0
    %69 = vmatprep.subr.bf16.mxu0 0
    %70 = vmatpush1.bf16.msra.mxu0 0
    %71 = vmatprep.mubr.bf16.mxu0 0
    %72 = vmatmul.mubr.bf16.gmra.mrb[0].mxu0 %v33
    %v73 = vpop.f32.mrb[0].mxu0
    %v74 = vadd.f32 %v24, %v73
    %v75 = vpop.f32.mrb[0].mxu0
    %v76 = vpop.f32.mrb[0].mxu0
    %v77 = vadd.f32 %v24, %v76
    %v78 = vpop.f32.mrb[0].mxu0
    %79 = vdwg.mxu0
    %v80 = vpack.c.bf16 %v77, %v74
    %v82 = vunpack.c.l.b16 %v80
    %v83 = vunpack.c.h.b16 %v80
    %v84 = vpack.c.b16 %v82, %v82
    %v85 = vpack.c.b16 %v83, %v83
    %88 = vst [vmem:[#allocation2] sm:$0xf] %v84
    %89 = vst [vmem:[#allocation2 + $0x4] sm:$0xf] %v85
    // Predicated region
    $region14: #{tpu_custom_call.1} parent=1 // pred_check
      _
    $region15: #{tpu_custom_call.1} parent=1 // pred_check_branch
      %91 = sbr.rel (0) target = $region17
    $region16: #{tpu_custom_call.1} parent=1 // pred_region
      %s93 = ssub.s32 128, 128
      %94 = vsyncadd [#allocation3], %s93
      %s95 = sshll.u32 [#allocation2], 4
      %s96 = int_to_ptr.vmem [resolvable:$true] %s95
      %101 = dma.vmem_to_hbm [thread:$0]  %s96, 128, %s3, [#allocation3], 64, 64, 4
    $region17: #{tpu_custom_call.1} parent=1 // pred_fallthru
      _
    // Predicated region
    $region18: #{tpu_custom_call.1} parent=1 // pred_check
      _
    $region19: #{tpu_custom_call.1} parent=1 // pred_check_branch
      %103 = sbr.rel (0) target = $region21
    $region20: #{tpu_custom_call.1} parent=1 // pred_region
      %104 = dma.done [#allocation3], 128
    $region21: #{tpu_custom_call.1} parent=1 // pred_fallthru
      _
    %105 = vsyncpa [#allocation3], 1

// kernel: tpu_custom_call.1
$region0: #{tpu_custom_call.1}
  #allocation0 [shape = 'u32[]', space=smem, size = 0x4, offset = 0x4, fixed_abs, tag = 'smem constant byte address 0x4 - core index']
  #allocation1 [shape = 'u32[144,128]{1,0:T(1,128)}', space=vmem, size = 0x12000, scoped, tag = 'internal scratch']
  %s0 = inlined_call_operand.vmem [shape: bf16[16,8], index: 0, kind: input, shape index: {}]
  %s1 = inlined_call_operand.vmem [shape: bf16[8,128], index: 1, kind: input, shape index: {}]
  %s2 = inlined_call_operand.vmem [shape: f32[1,128], index: 2, kind: input, shape index: {}]
  %s3 = inlined_call_operand.hbm [shape: bf16[16,128], index: 3, kind: output, shape index: {}]
  %s4 = sld [smem:[#allocation0]]
  $region22: #{tpu_custom_call.1} parent=0
    _
  %s6 = ssub.s32 1, %s4
  %s7 = scalar_select 0, %s6, %s4
  $region1: #{tpu_custom_call.1} parent=0
    #allocation2 [shape = 'u8[4096]{0}', space=vmem, size = 0x1000, scoped, tag = 'output window, operand 0, single buffered']
    #allocation3 [shape = 's32[1]{0}', space=sflag, size = 0x4, scoped, tag = 'scoped memory for tpu_custom_call.1']
    %8 = vsyncpa [#allocation3], 0
    // Predicated region
    $region2: #{tpu_custom_call.1} parent=1 // pred_check
      _
    $region3: #{tpu_custom_call.1} parent=1 // pred_check_branch
      %10 = sbr.rel (0) target = $region5
    $region4: #{tpu_custom_call.1} parent=1 // pred_region
      _
    $region5: #{tpu_custom_call.1} parent=1 // pred_fallthru
      _
    // Predicated region
    $region6: #{tpu_custom_call.1} parent=1 // pred_check
      _
    $region7: #{tpu_custom_call.1} parent=1 // pred_check_branch
      %12 = sbr.rel (0) target = $region9
    $region8: #{tpu_custom_call.1} parent=1 // pred_region
      _
    $region9: #{tpu_custom_call.1} parent=1 // pred_fallthru
      _
    // Predicated region
    $region10: #{tpu_custom_call.1} parent=1 // pred_check
      _
    $region11: #{tpu_custom_call.1} parent=1 // pred_check_branch
      %14 = sbr.rel (0) target = $region13
    $region12: #{tpu_custom_call.1} parent=1 // pred_region
      _
    $region13: #{tpu_custom_call.1} parent=1 // pred_fallthru
      _
    %v16 = vld [vmem:[%s0] sm:$0xf]
    %v17 = vld [vmem:[%s0 + $0x4] sm:$0xf]
    %v18 = vld [vmem:[%s1] sm:$0xf]
    %v19 = vld [vmem:[%s2] sm:$0x1]
    %v21 = vlaneseq
    %v22 = vshrl.u32 %v21, 7
    %v23 = vsub.s32 0, %v22
    %v24 = vrot.slane %v19, %v23
    %v28 = vunpack.c.l.b16 %v16
    %v29 = vunpack.c.l.b16 %v17
    %v30 = vpack.c.b16 %v29, %v28
    %vm31 = vcmask 64512
    %v33 = vsel %vm31, %v30, 0
    %vm35 = vcmask 1043456
    %v37 = vsel %vm35, %v18, 0
    %39 = vmatprep.subr.bf16.mxu0 0
    %40 = vmatpush1.bf16.msra.mxu0 %v37
    %41 = vmatprep.subr.bf16.mxu0 0
    %42 = vmatpush1.bf16.msra.mxu0 0
    %43 = vmatprep.subr.bf16.mxu0 0
    %44 = vmatpush1.bf16.msra.mxu0 0
    %45 = vmatprep.subr.bf16.mxu0 0
    %46 = vmatpush1.bf16.msra.mxu0 0
    %47 = vmatprep.subr.bf16.mxu0 0
    %48 = vmatpush1.bf16.msra.mxu0 0
    %49 = vmatprep.subr.bf16.mxu0 0
    %50 = vmatpush1.bf16.msra.mxu0 0
    %51 = vmatprep.subr.bf16.mxu0 0
    %52 = vmatpush1.bf16.msra.mxu0 0
    %53 = vmatprep.subr.bf16.mxu0 0
    %54 = vmatpush1.bf16.msra.mxu0 0
    %55 = vmatprep.subr.bf16.mxu0 0
    %56 = vmatpush1.bf16.msra.mxu0 0
    %57 = vmatprep.subr.bf16.mxu0 0
    %58 = vmatpush1.bf16.msra.mxu0 0
    %59 = vmatprep.subr.bf16.mxu0 0
    %60 = vmatpush1.bf16.msra.mxu0 0
    %61 = vmatprep.subr.bf16.mxu0 0
    %62 = vmatpush1.bf16.msra.mxu0 0
    %63 = vmatprep.subr.bf16.mxu0 0
    %64 = vmatpush1.bf16.msra.mxu0 0
    %65 = vmatprep.subr.bf16.mxu0 0
    %66 = vmatpush1.bf16.msra.mxu0 0
    %67 = vmatprep.subr.bf16.mxu0 0
    %68 = vmatpush1.bf16.msra.mxu0 0
    %69 = vmatprep.subr.bf16.mxu0 0
    %70 = vmatpush1.bf16.msra.mxu0 0
    %71 = vmatprep.mubr.bf16.mxu0 0
    %72 = vmatmul.mubr.bf16.gmra.mrb[0].mxu0 %v33
    %v73 = vpop.f32.mrb[0].mxu0
    %v74 = vadd.f32 %v24, %v73
    %v75 = vpop.f32.mrb[0].mxu0
    %v76 = vpop.f32.mrb[0].mxu0
    %v77 = vadd.f32 %v24, %v76
    %v78 = vpop.f32.mrb[0].mxu0
    %79 = vdwg.mxu0
    %v80 = vpack.c.bf16 %v77, %v74
    %v82 = vunpack.c.l.b16 %v80
    %v83 = vunpack.c.h.b16 %v80
    %v84 = vpack.c.b16 %v82, %v82
    %v85 = vpack.c.b16 %v83, %v83
    %88 = vst [vmem:[#allocation2] sm:$0xf] %v84
    %89 = vst [vmem:[#allocation2 + $0x4] sm:$0xf] %v85
    // Predicated region
    $region14: #{tpu_custom_call.1} parent=1 // pred_check
      _
    $region15: #{tpu_custom_call.1} parent=1 // pred_check_branch
      %91 = sbr.rel (0) target = $region17
    $region16: #{tpu_custom_call.1} parent=1 // pred_region
      %s93 = ssub.s32 128, 128
      %94 = vsyncadd [#allocation3], %s93
      %s95 = sshll.u32 [#allocation2], 4
      %s96 = int_to_ptr.vmem [resolvable:$true] %s95
      %101 = dma.vmem_to_hbm [thread:$0]  %s96, 128, %s3, [#allocation3], 64, 64, 4
    $region17: #{tpu_custom_call.1} parent=1 // pred_fallthru
      _
    // Predicated region
    $region18: #{tpu_custom_call.1} parent=1 // pred_check
      _
    $region19: #{tpu_custom_call.1} parent=1 // pred_check_branch
      %103 = sbr.rel (0) target = $region21
    $region20: #{tpu_custom_call.1} parent=1 // pred_region
      %104 = dma.done [#allocation3], 128
    $region21: #{tpu_custom_call.1} parent=1 // pred_fallthru
      _
    %105 = vsyncpa [#allocation3], 1

</llo_original>
